<compile_context>
chip_gen: v7x
topology: tpu7x:2x2x1
jax: 0.10.0
libtpu: 0.0.40
codegen_flags: <defaults>
</compile_context>

<pallas_src>
import functools

import jax
import jax.numpy as jnp
from jax.experimental import pallas as pl
from jax.experimental.pallas import tpu as pltpu


def _round_up(x: int, m: int) -> int:
    return ((x + m - 1) // m) * m


def _pick_tile(padded_dim: int, preferred: int, align: int) -> int:
    """Largest multiple of `align` that divides `padded_dim` and is <= preferred."""
    t = min(preferred, padded_dim)
    t = max((t // align) * align, align)
    while padded_dim % t != 0:
        t -= align
    return t


def _linear_kernel(x_ref, w_ref, b_ref, o_ref, acc_ref):
    # x_ref: (tm, tk)   w_ref: (tk, tn)  [pre-transposed W.T tile]
    # b_ref: (1, tn)    o_ref: (tm, tn)  acc_ref: (tm, tn) f32 scratch
    k = pl.program_id(2)

    @pl.when(k == 0)
    def _():
        # Seed the accumulator with the broadcast bias instead of adding it in
        # the epilogue: saves one (tm, tn) VPU add off the finalize path.
        acc_ref[...] = jnp.broadcast_to(b_ref[...], acc_ref.shape).astype(jnp.float32)

    acc_ref[...] += jnp.dot(
        x_ref[...], w_ref[...], preferred_element_type=jnp.float32
    )

    @pl.when(k == pl.num_programs(2) - 1)
    def _():
        o_ref[...] = acc_ref[...].astype(o_ref.dtype)


def prepare_linear_params(weight, bias):
    """One-time re-layout of nn.Linear parameters (static for inference).

    weight: (out_dim, inp_dim)  PyTorch layout
    bias:   (out_dim,)
    Returns (w_t_padded: (Kp, Np), bias_padded: (1, Np)), Kp/Np multiples of 128.
    Zero-padding is benign for the matmul; padded N columns are sliced off later.
    """
    N, K = weight.shape
    Kp, Np = _round_up(K, 128), _round_up(N, 128)
    w_t = weight.T  # (K, N): MXU-friendly contraction layout, transposed once
    if (Kp, Np) != (K, N):
        w_t = jnp.pad(w_t, ((0, Kp - K), (0, Np - N)))
    b = bias if Np == N else jnp.pad(bias, (0, Np - N))
    return w_t, b.reshape(1, Np)


def linear_forward(x, w_t_padded, b_padded, out_dim, *, tm=512, tn=1024, tk=512):
    """x: (M, K) f32; w_t_padded: (Kp, Np); b_padded: (1, Np) -> (M, out_dim)."""
    M, K = x.shape
    Kp, Np = w_t_padded.shape

    # Pad x only to hardware alignment (8 sublanes / 128-lane K to match the
    # pre-padded weight), NOT to tile multiples.
    Mp = _round_up(M, 8)
    xp = x if (Mp == M and Kp == K) else jnp.pad(x, ((0, Mp - M), (0, Kp - K)))

    # Tiles must divide the (lightly) padded dims — shrink instead of re-padding.
    tm = _pick_tile(Mp, tm, 8)
    tn = _pick_tile(Np, tn, 128)
    tk = _pick_tile(Kp, tk, 128)

    # Dual-TensorCore parts (v7x): make sure the product of the parallel grid
    # axes is >= 2 when the problem allows it, so neither core idles.
    if (Mp // tm) * (Np // tn) < 2:
        if tn >= 256:
            tn //= 2                       # still a multiple of 128, still divides Np
        elif tm >= 16:
            tm = _pick_tile(Mp, tm // 2, 8)

    grid = (Mp // tm, Np // tn, Kp // tk)

    # bytes_accessed reflects actual HBM re-streaming:
    #   x is read (Np/tn) times, the weight (Mp/tm) times.
    itemsize = x.dtype.itemsize
    cost = pl.CostEstimate(
        flops=2 * Mp * Np * Kp,
        transcendentals=0,
        bytes_accessed=(
            Mp * Kp * (Np // tn) + Kp * Np * (Mp // tm) + Np * (Mp // tm) + Mp * Np
        ) * itemsize,
    )

    out = pl.pallas_call(
        _linear_kernel,
        out_shape=jax.ShapeDtypeStruct((Mp, Np), x.dtype),
        grid_spec=pltpu.PrefetchScalarGridSpec(
            num_scalar_prefetch=0,
            grid=grid,
            in_specs=[
                pl.BlockSpec((tm, tk), lambda i, j, k: (i, k)),  # x tile
                pl.BlockSpec((tk, tn), lambda i, j, k: (k, j)),  # W.T tile
                pl.BlockSpec((1, tn), lambda i, j, k: (0, j)),   # bias tile
            ],
            out_specs=pl.BlockSpec((tm, tn), lambda i, j, k: (i, j)),
            scratch_shapes=[pltpu.VMEM((tm, tn), jnp.float32)],
        ),
        compiler_params=pltpu.CompilerParams(
            dimension_semantics=("parallel", "parallel", "arbitrary"),
            # ~13 MiB footprint at the default tiles; raise the scoped limit
            # above v5e's 16 MiB default while staying below v7x's 64 MiB
            # physical VMEM.
            vmem_limit_bytes=48 * 1024 * 1024,
        ),
        cost_estimate=cost,
    )(xp, w_t_padded, b_padded)

    if Mp != M or Np != out_dim:
        out = out[:M, :out_dim]
    return out


def linear_regression_forward(x, weight, bias, **tile_kw):
    """Convenience path: forward(x) = x @ weight.T + bias (PyTorch layout params)."""
    w_t_padded, b_padded = prepare_linear_params(weight, bias)
    return linear_forward(x, w_t_padded, b_padded, weight.shape[0], **tile_kw)


if __name__ == "__main__":
    # Small shapes consistent with nn.Linear(inp_dim, out_dim)
    batch, inp_dim, out_dim = 8, 32, 16

    key = jax.random.PRNGKey(0)
    kx, kw, kb = jax.random.split(key, 3)

    x = jax.random.normal(kx, (batch, inp_dim), dtype=jnp.float32)
    bound = 1.0 / (inp_dim ** 0.5)
    weight = jax.random.uniform(kw, (out_dim, inp_dim), jnp.float32, -bound, bound)
    bias = jax.random.uniform(kb, (out_dim,), jnp.float32, -bound, bound)

    # One-time parameter re-layout (out of the per-call path), then jitted forward.
    w_t_padded, b_padded = prepare_linear_params(weight, bias)
    fwd = jax.jit(functools.partial(linear_forward, out_dim=out_dim))
    out = fwd(x, w_t_padded, b_padded)
    jax.block_until_ready(out)

    ref = x @ weight.T + bias
    assert out.shape == (batch, out_dim)
    assert jnp.allclose(out, ref, atol=1e-5, rtol=1e-5)

    # Larger ragged shape: exercises 8/128 alignment padding, tile shrinking,
    # multi-step K reduction and the v7x parallel-grid split.
    kx2, kw2, kb2 = jax.random.split(jax.random.PRNGKey(1), 3)
    M2, K2, N2 = 300, 640, 200
    x2 = jax.random.normal(kx2, (M2, K2), dtype=jnp.float32)
    w2 = jax.random.normal(kw2, (N2, K2), dtype=jnp.float32) * 0.05
    b2 = jax.random.normal(kb2, (N2,), dtype=jnp.float32)
    out2 = linear_regression_forward(x2, w2, b2)
    jax.block_until_ready(out2)
    ref2 = x2 @ w2.T + b2
    assert out2.shape == (M2, N2)
    assert jnp.allclose(out2, ref2, atol=1e-3, rtol=1e-3)

    print("KERNEL_OK")
</pallas_src>

<mosaic_0001>
module attributes {stable_mosaic.version = 11 : i64} {
  func.func @_linear_kernel(%arg0: i32, %arg1: i32, %arg2: i32, %arg3: memref<8x128xf32, #tpu.memory_space<vmem>>, %arg4: memref<128x128xf32, #tpu.memory_space<vmem>>, %arg5: memref<1x128xf32, #tpu.memory_space<vmem>>, %arg6: memref<8x128xf32, #tpu.memory_space<vmem>>, %arg7: memref<8x128xf32, #tpu.memory_space<vmem>>) attributes {dimension_semantics = [#tpu.dimension_semantics<parallel>, #tpu.dimension_semantics<parallel>, #tpu.dimension_semantics<arbitrary>], iteration_bounds = array<i64: 1, 1, 1>, scalar_prefetch = 0 : i64, scratch_operands = 1 : i64, tpu.core_type = #tpu.core_type<tc>, window_params = [{transform_indices = @transform_0, window_bounds = array<i64: 8, 128>}, {transform_indices = @transform_1, window_bounds = array<i64: 128, 128>}, {transform_indices = @transform_2, window_bounds = array<i64: 1, 128>}, {transform_indices = @transform_3, window_bounds = array<i64: 8, 128>}]} {
    %c0_i32 = arith.constant 0 : i32
    %0 = arith.cmpi eq, %arg2, %c0_i32 : i32
    %1 = arith.extui %0 : i1 to i32
    %c0_i32_0 = arith.constant 0 : i32
    %2 = arith.cmpi ne, %1, %c0_i32_0 : i32
    scf.if %2 {
      %c0_10 = arith.constant 0 : index
      %c0_11 = arith.constant 0 : index
      %12 = vector.load %arg5[%c0_10, %c0_11] : memref<1x128xf32, #tpu.memory_space<vmem>>, vector<1x128xf32>
      %13 = vector.shape_cast %12 : vector<1x128xf32> to vector<1x128xf32>
      %14 = vector.broadcast %13 : vector<1x128xf32> to vector<8x128xf32>
      %c0_12 = arith.constant 0 : index
      %c0_13 = arith.constant 0 : index
      %15 = vector.load %arg7[%c0_12, %c0_13] : memref<8x128xf32, #tpu.memory_space<vmem>>, vector<8x128xf32>
      tpu.vector_store %arg7[%c0_12, %c0_13], %14 {strides = array<i32>} : memref<8x128xf32, #tpu.memory_space<vmem>>, vector<8x128xf32>,
    } else {
    }
    %c0 = arith.constant 0 : index
    %c0_1 = arith.constant 0 : index
    %3 = vector.load %arg7[%c0, %c0_1] : memref<8x128xf32, #tpu.memory_space<vmem>>, vector<8x128xf32>
    %c0_2 = arith.constant 0 : index
    %c0_3 = arith.constant 0 : index
    %4 = vector.load %arg3[%c0_2, %c0_3] : memref<8x128xf32, #tpu.memory_space<vmem>>, vector<8x128xf32>
    %c0_4 = arith.constant 0 : index
    %c0_5 = arith.constant 0 : index
    %5 = vector.load %arg4[%c0_4, %c0_5] : memref<128x128xf32, #tpu.memory_space<vmem>>, vector<128x128xf32>
    %cst = arith.constant dense<0.000000e+00> : vector<8x128xf32>
    %6 = tpu.matmul %4, %5, %cst {dimension_numbers = #tpu.dot_dimension_numbers<[1], [0], [0], [1], [0, 0, 1, 1], [], []>} : vector<8x128xf32>, vector<128x128xf32>, vector<8x128xf32> -> vector<8x128xf32>
    %7 = arith.addf %3, %6 : vector<8x128xf32>
    %c0_6 = arith.constant 0 : index
    %c0_7 = arith.constant 0 : index
    %8 = vector.load %arg7[%c0_6, %c0_7] : memref<8x128xf32, #tpu.memory_space<vmem>>, vector<8x128xf32>
    tpu.vector_store %arg7[%c0_6, %c0_7], %7 {strides = array<i32>} : memref<8x128xf32, #tpu.memory_space<vmem>>, vector<8x128xf32>,
    %c0_i32_8 = arith.constant 0 : i32
    %9 = arith.cmpi eq, %arg2, %c0_i32_8 : i32
    %10 = arith.extui %9 : i1 to i32
    %c0_i32_9 = arith.constant 0 : i32
    %11 = arith.cmpi ne, %10, %c0_i32_9 : i32
    scf.if %11 {
      %c0_10 = arith.constant 0 : index
      %c0_11 = arith.constant 0 : index
      %12 = vector.load %arg7[%c0_10, %c0_11] : memref<8x128xf32, #tpu.memory_space<vmem>>, vector<8x128xf32>
      %c0_12 = arith.constant 0 : index
      %c0_13 = arith.constant 0 : index
      %13 = vector.load %arg6[%c0_12, %c0_13] : memref<8x128xf32, #tpu.memory_space<vmem>>, vector<8x128xf32>
      tpu.vector_store %arg6[%c0_12, %c0_13], %12 {strides = array<i32>} : memref<8x128xf32, #tpu.memory_space<vmem>>, vector<8x128xf32>,
    } else {
    }
    return
  }
  func.func @transform_0(%arg0: i32, %arg1: i32, %arg2: i32) -> (i32, i32) {
    %c0_i32 = arith.constant 0 : i32
    return %arg0, %arg2 : i32, i32
  }
  func.func @transform_1(%arg0: i32, %arg1: i32, %arg2: i32) -> (i32, i32) {
    %c0_i32 = arith.constant 0 : i32
    return %arg2, %arg1 : i32, i32
  }
  func.func @transform_2(%arg0: i32, %arg1: i32, %arg2: i32) -> (i32, i32) {
    %c0_i32 = arith.constant 0 : i32
    %c0_i32_0 = arith.constant 0 : i32
    return %c0_i32, %arg1 : i32, i32
  }
  func.func @transform_3(%arg0: i32, %arg1: i32, %arg2: i32) -> (i32, i32) {
    %c0_i32 = arith.constant 0 : i32
    return %arg0, %arg1 : i32, i32
  }
}

</mosaic_0001>

<llo_original>
// kernel: linear_forward.1
$region0: #{linear_forward.1}
  #allocation0 [shape = 'u32[]', space=smem, size = 0x4, offset = 0x4, fixed_abs, tag = 'smem constant byte address 0x4 - core index']
  #allocation1 [shape = 'u32[144,128]{1,0:T(1,128)}', space=vmem, size = 0x12000, scoped, tag = 'internal scratch']
  #allocation2 [shape = 'f32[8,128]{1,0:T(8,128)}', space=vmem, size = 0x1000, scoped, tag = 'scratch operand']
  %s0 = inlined_call_operand.vmem [shape: f32[8,128], index: 0, kind: input, shape index: {}]
  %s1 = inlined_call_operand.hbm [shape: f32[128,128], index: 1, kind: input, shape index: {}]
  %s2 = inlined_call_operand.vmem [shape: f32[1,128], index: 2, kind: input, shape index: {}]
  %s3 = inlined_call_operand.hbm [shape: f32[8,128], index: 3, kind: output, shape index: {}]
  %s4 = sld [smem:[#allocation0]]
  $region34: #{linear_forward.1} parent=0
    _
  %s6 = ssub.s32 1, %s4
  %s7 = scalar_select 0, %s6, %s4
  $region1: #{linear_forward.1} parent=0
    #allocation3 [shape = 'u8[65536]{0}', space=vmem, size = 0x10000, scoped, tag = 'input window, operand 1, single buffered']
    #allocation4 [shape = 's32[1]{0}', space=sflag, size = 0x4, scoped, tag = 'scoped memory for linear_forward.1']
    #allocation5 [shape = 's32[1]{0}', space=sflag, size = 0x4, scoped, tag = 'scoped memory for linear_forward.1']
    #allocation6 [shape = 'u8[4096]{0}', space=vmem, size = 0x1000, scoped, tag = 'output window, operand 0, single buffered']
    %8 = vsyncpa [#allocation4], 0
    %9 = vsyncpa [#allocation5], 0
    // Predicated region
    $region2: #{linear_forward.1} parent=1 // pred_check
      _
    $region3: #{linear_forward.1} parent=1 // pred_check_branch
      %11 = sbr.rel (0) target = $region5
    $region4: #{linear_forward.1} parent=1 // pred_region
      _
    $region5: #{linear_forward.1} parent=1 // pred_fallthru
      _
    // Predicated region
    $region6: #{linear_forward.1} parent=1 // pred_check
      _
    $region7: #{linear_forward.1} parent=1 // pred_check_branch
      %13 = sbr.rel (0) target = $region9
    $region8: #{linear_forward.1} parent=1 // pred_region
      %s15 = ssub.s32 2048, 2048
      %16 = vsyncadd [#allocation4], %s15
      %s17 = sshll.u32 [#allocation3], 4
      %s18 = int_to_ptr.vmem [resolvable:$true] %s17
      %23 = dma.hbm_to_vmem [thread:$0]  %s1, 2048, %s18, [#allocation4], 128, 128, 8
    $region9: #{linear_forward.1} parent=1 // pred_fallthru
      _
    // Predicated region
    $region10: #{linear_forward.1} parent=1 // pred_check
      _
    $region11: #{linear_forward.1} parent=1 // pred_check_branch
      %25 = sbr.rel (0) target = $region13
    $region12: #{linear_forward.1} parent=1 // pred_region
      _
    $region13: #{linear_forward.1} parent=1 // pred_fallthru
      _
    // Predicated region
    $region14: #{linear_forward.1} parent=1 // pred_check
      _
    $region15: #{linear_forward.1} parent=1 // pred_check_branch
      %27 = sbr.rel (0) target = $region17
    $region16: #{linear_forward.1} parent=1 // pred_region
      %28 = dma.done [#allocation4], 2048
    $region17: #{linear_forward.1} parent=1 // pred_fallthru
      _
    %p29 = scmp.eq.s32.totalorder 0, 0
    // Predicated region
    $region18: #{linear_forward.1} parent=1 // pred_check
      %p30 = pneg %p29
    $region19: #{linear_forward.1} parent=1 // pred_check_branch
      %32 = sbr.rel (%p30) target = $region21
    $region20: #{linear_forward.1} parent=1 // pred_region
      %v33 = vld [vmem:[%s2] sm:$0x1]
      %v35 = vlaneseq
      %v36 = vshrl.u32 %v35, 7
      %v37 = vsub.s32 0, %v36
      %v38 = vrot.slane %v33, %v37
      %40 = vst [vmem:[#allocation2] sm:$0xff] %v38
    $region21: #{linear_forward.1} parent=1 // pred_fallthru
      _
    %v41 = vld [vmem:[#allocation2] sm:$0xff]
    %v42 = vld [vmem:[%s0] sm:$0xff]
    %v43 = vld [vmem:[#allocation3] sm:$0xff]
    %v44 = vld [vmem:[#allocation3 + $0x8] sm:$0xff]
    %v45 = vld [vmem:[#allocation3 + $0x10] sm:$0xff]
    %v46 = vld [vmem:[#allocation3 + $0x18] sm:$0xff]
    %v47 = vld [vmem:[#allocation3 + $0x20] sm:$0xff]
    %v48 = vld [vmem:[#allocation3 + $0x28] sm:$0xff]
    %v49 = vld [vmem:[#allocation3 + $0x30] sm:$0xff]
    %v50 = vld [vmem:[#allocation3 + $0x38] sm:$0xff]
    %v51 = vld [vmem:[#allocation3 + $0x40] sm:$0xff]
    %v52 = vld [vmem:[#allocation3 + $0x48] sm:$0xff]
    %v53 = vld [vmem:[#allocation3 + $0x50] sm:$0xff]
    %v54 = vld [vmem:[#allocation3 + $0x58] sm:$0xff]
    %v55 = vld [vmem:[#allocation3 + $0x60] sm:$0xff]
    %v56 = vld [vmem:[#allocation3 + $0x68] sm:$0xff]
    %v57 = vld [vmem:[#allocation3 + $0x70] sm:$0xff]
    %v58 = vld [vmem:[#allocation3 + $0x78] sm:$0xff]
    %59 = vmatprep.subr.mxu0 0.0
    %60 = vmatpush1.msra.mxu0 %v43
    %61 = vmatprep.subr.mxu0 0.0
    %62 = vmatpush1.msra.mxu0 %v44
    %63 = vmatprep.subr.mxu0 0.0
    %64 = vmatpush1.msra.mxu0 %v45
    %65 = vmatprep.subr.mxu0 0.0
    %66 = vmatpush1.msra.mxu0 %v46
    %67 = vmatprep.subr.mxu0 0.0
    %68 = vmatpush1.msra.mxu0 %v47
    %69 = vmatprep.subr.mxu0 0.0
    %70 = vmatpush1.msra.mxu0 %v48
    %71 = vmatprep.subr.mxu0 0.0
    %72 = vmatpush1.msra.mxu0 %v49
    %73 = vmatprep.subr.mxu0 0.0
    %74 = vmatpush1.msra.mxu0 %v50
    %75 = vmatprep.subr.mxu0 0.0
    %76 = vmatpush1.msra.mxu0 %v51
    %77 = vmatprep.subr.mxu0 0.0
    %78 = vmatpush1.msra.mxu0 %v52
    %79 = vmatprep.subr.mxu0 0.0
    %80 = vmatpush1.msra.mxu0 %v53
    %81 = vmatprep.subr.mxu0 0.0
    %82 = vmatpush1.msra.mxu0 %v54
    %83 = vmatprep.subr.mxu0 0.0
    %84 = vmatpush1.msra.mxu0 %v55
    %85 = vmatprep.subr.mxu0 0.0
    %86 = vmatpush1.msra.mxu0 %v56
    %87 = vmatprep.subr.mxu0 0.0
    %88 = vmatpush1.msra.mxu0 %v57
    %89 = vmatprep.subr.mxu0 0.0
    %90 = vmatpush1.msra.mxu0 %v58
    %91 = vmatprep.subr.mxu0 0.0
    %92 = vmatpush1.msra.mxu0 0.0
    %93 = vmatprep.subr.mxu0 0.0
    %94 = vmatpush1.msra.mxu0 0.0
    %95 = vmatprep.subr.mxu0 0.0
    %96 = vmatpush1.msra.mxu0 0.0
    %97 = vmatprep.subr.mxu0 0.0
    %98 = vmatpush1.msra.mxu0 0.0
    %99 = vmatprep.subr.mxu0 0.0
    %100 = vmatpush1.msra.mxu0 0.0
    %101 = vmatprep.subr.mxu0 0.0
    %102 = vmatpush1.msra.mxu0 0.0
    %103 = vmatprep.subr.mxu0 0.0
    %104 = vmatpush1.msra.mxu0 0.0
    %105 = vmatprep.subr.mxu0 0.0
    %106 = vmatpush1.msra.mxu0 0.0
    %107 = vmatprep.subr.mxu0 0.0
    %108 = vmatpush1.msra.mxu0 0.0
    %109 = vmatprep.subr.mxu0 0.0
    %110 = vmatpush1.msra.mxu0 0.0
    %111 = vmatprep.subr.mxu0 0.0
    %112 = vmatpush1.msra.mxu0 0.0
    %113 = vmatprep.subr.mxu0 0.0
    %114 = vmatpush1.msra.mxu0 0.0
    %115 = vmatprep.subr.mxu0 0.0
    %116 = vmatpush1.msra.mxu0 0.0
    %117 = vmatprep.subr.mxu0 0.0
    %118 = vmatpush1.msra.mxu0 0.0
    %119 = vmatprep.subr.mxu0 0.0
    %120 = vmatpush1.msra.mxu0 0.0
    %121 = vmatprep.subr.mxu0 0.0
    %122 = vmatpush1.msra.mxu0 0.0
    %123 = vmatprep.mubr.f32.mxu0 0.0
    %124 = vmatmul.mubr.f32.gmra.mrb[0].mxu0 %v42
    %v125 = vpop.f32.mrb[0].mxu0
    %v126 = vadd.f32 0.0, %v125
    %v127 = vpop.f32.mrb[0].mxu0
    %128 = vdwg.mxu0
    %v129 = vadd.f32 %v41, %v126
    %130 = vst [vmem:[#allocation2] sm:$0xff] %v129
    // Predicated region
    $region22: #{linear_forward.1} parent=1 // pred_check
      %p131 = pneg %p29
    $region23: #{linear_forward.1} parent=1 // pred_check_branch
      %133 = sbr.rel (%p131) target = $region25
    $region24: #{linear_forward.1} parent=1 // pred_region
      %v134 = vld [vmem:[#allocation2] sm:$0xff]
      %135 = vst [vmem:[#allocation6] sm:$0xff] %v134
    $region25: #{linear_forward.1} parent=1 // pred_fallthru
      _
    // Predicated region
    $region26: #{linear_forward.1} parent=1 // pred_check
      _
    $region27: #{linear_forward.1} parent=1 // pred_check_branch
      %137 = sbr.rel (0) target = $region29
    $region28: #{linear_forward.1} parent=1 // pred_region
      %s139 = ssub.s32 128, 128
      %140 = vsyncadd [#allocation5], %s139
      %s142 = sshll.u32 [#allocation6], 4
      %s143 = int_to_ptr.vmem [resolvable:$true] %s142
      %145 = dma.vmem_to_hbm [thread:$0]  %s143, 128, %s3, [#allocation5]
    $region29: #{linear_forward.1} parent=1 // pred_fallthru
      _
    // Predicated region
    $region30: #{linear_forward.1} parent=1 // pred_check
      _
    $region31: #{linear_forward.1} parent=1 // pred_check_branch
      %147 = sbr.rel (0) target = $region33
    $region32: #{linear_forward.1} parent=1 // pred_region
      %148 = dma.done [#allocation5], 128
    $region33: #{linear_forward.1} parent=1 // pred_fallthru
      _
    %149 = vsyncpa [#allocation4], 1
    %150 = vsyncpa [#allocation5], 1

</llo_original>
